<compile_context>
chip_gen: v6e
topology: v6e:2x2x1
jax: 0.10.0
libtpu: 0.0.40
codegen_flags: <defaults>
</compile_context>

<pallas_src>
import math
import functools

import jax
import jax.numpy as jnp
from jax.experimental import pallas as pl
from jax.experimental.pallas import tpu as pltpu


def _embed_row_kernel(ids_ref, lut_row_ref, out_ref, *, scale):
    # ids_ref:     (n,) int32 in SMEM (scalar prefetch) — only used by index_maps
    # lut_row_ref: (1, 1, d_model) — the gathered embedding row for this token
    # out_ref:     (1, 1, d_model) — output row for this token
    del ids_ref
    row = lut_row_ref[...].astype(jnp.float32)
    out_ref[...] = (row * scale).astype(out_ref.dtype)


def embeddings_forward(token_ids, lut):
    """token_ids: (B, S) int; lut: (vocab, d_model) -> (B, S, d_model) lut.dtype."""
    B, S = token_ids.shape
    vocab, d_model = lut.shape
    n = B * S
    scale = float(math.sqrt(d_model))

    # Ids -> SMEM scalar prefetch. Clamp so the data-dependent index_map can
    # never address past the table (PyTorch raises on OOB ids; we clamp).
    flat_ids = jnp.clip(token_ids.reshape(n).astype(jnp.int32), 0, vocab - 1)

    # Unit-dim views so each block's last two dims equal the full array dims.
    lut3 = lut.reshape(vocab, 1, d_model)

    out = pl.pallas_call(
        functools.partial(_embed_row_kernel, scale=scale),
        out_shape=jax.ShapeDtypeStruct((n, 1, d_model), lut.dtype),
        grid_spec=pltpu.PrefetchScalarGridSpec(
            num_scalar_prefetch=1,
            grid=(n,),
            in_specs=[
                # Data-dependent row gather: block index along the vocab axis
                # comes straight from the prefetched token id.
                pl.BlockSpec((1, 1, d_model), lambda i, ids: (ids[i], 0, 0)),
            ],
            out_specs=pl.BlockSpec((1, 1, d_model), lambda i, ids: (i, 0, 0)),
        ),
        compiler_params=pltpu.CompilerParams(
            # Token rows are independent; lets v7x shard across its 2 TCs.
            # (If the Mosaic dump shows no 2-TC split, switch this axis to
            #  pltpu.CORE_PARALLEL.)
            dimension_semantics=("parallel",),
        ),
    )(flat_ids, lut3)

    # TODO(synk): for small d_model the ~0.35us/grid-step overhead dominates a
    # 1-row/step gather; a multi-row manual-DMA gather (ids in SMEM, lut in
    # pl.ANY, tok_tile row copies per step into VMEM scratch) would amortize it
    # while staying HBM-bound.
    return out.reshape(B, S, d_model)


if __name__ == "__main__":
    # Deterministic synthetic parameters / inputs (no checkpoint loading).
    key = jax.random.PRNGKey(0)
    k_lut, k_ids = jax.random.split(key)

    vocab = 32
    d_model = 128
    B, S = 2, 8

    lut = jax.random.normal(k_lut, (vocab, d_model), dtype=jnp.float32)
    token_ids = jax.random.randint(k_ids, (B, S), minval=0, maxval=vocab,
                                   dtype=jnp.int32)

    out = embeddings_forward(token_ids, lut)
    out = jax.block_until_ready(out)

    # Reference (plain JAX) check of the same semantics.
    ref = jnp.take(lut, token_ids, axis=0) * math.sqrt(d_model)
    assert out.shape == (B, S, d_model)
    assert jnp.allclose(out, ref, atol=1e-5, rtol=1e-5)

    print("KERNEL_OK")
</pallas_src>

<mosaic_0001>
module attributes {stable_mosaic.version = 11 : i64} {
  func.func @_embed_row_kernel(%arg0: i32, %arg1: memref<16xi32, #tpu.memory_space<smem>>, %arg2: memref<1x1x128xf32, #tpu.memory_space<vmem>>, %arg3: memref<1x1x128xf32, #tpu.memory_space<vmem>>) attributes {dimension_semantics = [#tpu.dimension_semantics<parallel>], iteration_bounds = array<i64: 16>, scalar_prefetch = 1 : i64, scratch_operands = 0 : i64, tpu.core_type = #tpu.core_type<tc>, window_params = [{transform_indices = @transform_0, window_bounds = array<i64: 1, 1, 128>}, {transform_indices = @transform_1, window_bounds = array<i64: 1, 1, 128>}]} {
    %c0 = arith.constant 0 : index
    %c0_0 = arith.constant 0 : index
    %c0_1 = arith.constant 0 : index
    %0 = vector.load %arg2[%c0, %c0_0, %c0_1] : memref<1x1x128xf32, #tpu.memory_space<vmem>>, vector<1x1x128xf32>
    %cst = arith.constant 11.3137083 : f32
    %1 = vector.broadcast %cst : f32 to vector<1x1x128xf32>
    %2 = arith.mulf %0, %1 : vector<1x1x128xf32>
    %c0_2 = arith.constant 0 : index
    %c0_3 = arith.constant 0 : index
    %c0_4 = arith.constant 0 : index
    %3 = vector.load %arg3[%c0_2, %c0_3, %c0_4] : memref<1x1x128xf32, #tpu.memory_space<vmem>>, vector<1x1x128xf32>
    tpu.vector_store %arg3[%c0_2, %c0_3, %c0_4], %2 {strides = array<i32>} : memref<1x1x128xf32, #tpu.memory_space<vmem>>, vector<1x1x128xf32>,
    return
  }
  func.func @transform_0(%arg0: i32, %arg1: memref<16xi32, #tpu.memory_space<smem>>) -> (i32, i32, i32) {
    %0 = arith.index_cast %arg0 : i32 to index
    %1 = memref.load %arg1[%0] : memref<16xi32, #tpu.memory_space<smem>>
    %c0_i32 = arith.constant 0 : i32
    %c0_i32_0 = arith.constant 0 : i32
    %c0_i32_1 = arith.constant 0 : i32
    return %1, %c0_i32, %c0_i32_0 : i32, i32, i32
  }
  func.func @transform_1(%arg0: i32, %arg1: memref<16xi32, #tpu.memory_space<smem>>) -> (i32, i32, i32) {
    %c0_i32 = arith.constant 0 : i32
    %c0_i32_0 = arith.constant 0 : i32
    %c0_i32_1 = arith.constant 0 : i32
    return %arg0, %c0_i32, %c0_i32_0 : i32, i32, i32
  }
}

</mosaic_0001>

<llo_original>
// kernel: tpu_custom_call.1
$region0: #{tpu_custom_call.1}
  #allocation0 [shape = 'u32[]', space=smem, size = 0x4, offset = 0x4, fixed_abs, tag = 'smem constant byte address 0x4 - core index']
  #allocation1 [shape = 'u32[144,128]{1,0:T(1,128)}', space=vmem, size = 0x12000, scoped, tag = 'internal scratch']
  #allocation2 [shape = 's32[1]{0}', space=sflag, size = 0x4, scoped, tag = 'scoped memory for tpu_custom_call.1']
  #allocation3 [shape = 'u8[512]{0}', space=smem, size = 0x200, scoped, tag = 'prefetched SMEM operand 0']
  %s0 = inlined_call_operand.hbm [shape: s32[16], index: 0, kind: input, shape index: {}]
  %s1 = inlined_call_operand.hbm [shape: f32[32,1,128], index: 1, kind: input, shape index: {}]
  %s2 = inlined_call_operand.hbm [shape: f32[16,1,128], index: 2, kind: output, shape index: {}]
  %s3 = sld [smem:[#allocation0]]
  $region41: #{tpu_custom_call.1} parent=0
    _
  %s5 = ssub.s32 1, %s3
  %s6 = scalar_select 0, %s5, %s3
  %8 = dma.hbm_to_smem %s0, 16, [#allocation3], [#allocation2]
  %9 = dma.done [#allocation2], 16
  %10 = sfence
  $region1: #{tpu_custom_call.1} parent=0
    #allocation4 [shape = 'u8[1024]{0}', space=vmem, size = 0x400, scoped, tag = 'input window, operand 1']
    #allocation5 [shape = 's32[2]{0}', space=sflag, size = 0x8, scoped, tag = 'scoped memory for tpu_custom_call.1']
    #allocation6 [shape = 's32[2]{0}', space=sflag, size = 0x8, scoped, tag = 'scoped memory for tpu_custom_call.1']
    #allocation7 [shape = 'u8[1024]{0}', space=vmem, size = 0x400, scoped, tag = 'output window, operand 0']
    %11 = vsyncpa [#allocation5], 0
    %s12 = scalar_lea.sflag [#allocation5], 1
    %13 = vsyncpa %s12, 0
    %14 = vsyncpa [#allocation6], 0
    %s15 = scalar_lea.sflag [#allocation6], 1
    %16 = vsyncpa %s15, 0
    loop: start=0, step=1, limit=18
    $region2: #{tpu_custom_call.1} parent=1 // loop_pre_header
      _
    $region3: #{tpu_custom_call.1} parent=1 // loop_header
      %s18 = sphi 0, %s22
      %p19 = scmp.ge.s32.totalorder %s18, 18
      %s30 = sphi 0, %s32
      %s33 = sphi 0, %s30
      %s34 = sphi 0, %s33
      %s50 = sphi 0, %s34
      %s56 = sphi 0, %s58
      %s59 = sphi 0, %s56
      %s60 = sphi 0, %s59
      %s76 = sphi 0, %s60
    $region4: #{tpu_custom_call.1} parent=1 // loop_header_branch
      %21 = sbr.rel (%p19) target = $region8
    $region5: #{tpu_custom_call.1} parent=1 // loop_body
      %s23 = ssub.s32 %s18, 1
      %s24 = ssub.s32 %s18, 2
      %s25 = sadd.s32 %s18, 1
      %s26 = sld [smem:[#allocation3 + %s18]]
      %s27 = sld [smem:[#allocation3 + %s25]]
      %s28 = ssub.s32 %s26, %s27
      %p29 = scmp.eq.s32.totalorder %s28, 0
      %s31 = sadd.s32 %s30, 1
      %s32 = scalar_select %p29, %s30, %s31
      %p35 = pneg %p29
      %p36 = scmp.eq.s32.totalorder %s18, 15
      %p37 = por %p35, %p36
      %p38 = scmp.ne.s32.totalorder %s30, %s33
      %p39 = scmp.eq.s32.totalorder %s18, 0
      %p40 = por %p38, %p39
      %p41 = scmp.ne.s32.totalorder %s30, %s33
      %p42 = scmp.eq.s32.totalorder %s23, 15
      %p43 = por %p41, %p42
      %p44 = scmp.ne.s32.totalorder %s33, %s34
      %p45 = scmp.eq.s32.totalorder %s23, 0
      %p46 = por %p44, %p45
      %p47 = scmp.ne.s32.totalorder %s33, %s34
      %p48 = scmp.eq.s32.totalorder %s24, 15
      %p49 = por %p47, %p48
      %p51 = scmp.ne.s32.totalorder %s34, %s50
      %p52 = scmp.eq.s32.totalorder %s24, 0
      %p53 = por %p51, %p52
      %s54 = ssub.s32 %s18, %s25
      %p55 = scmp.eq.s32.totalorder %s54, 0
      %s57 = sadd.s32 %s56, 1
      %s58 = scalar_select %p55, %s56, %s57
      %p61 = pneg %p55
      %p62 = scmp.eq.s32.totalorder %s18, 15
      %p63 = por %p61, %p62
      %p64 = scmp.ne.s32.totalorder %s56, %s59
      %p65 = scmp.eq.s32.totalorder %s18, 0
      %p66 = por %p64, %p65
      %p67 = scmp.ne.s32.totalorder %s56, %s59
      %p68 = scmp.eq.s32.totalorder %s23, 15
      %p69 = por %p67, %p68
      %p70 = scmp.ne.s32.totalorder %s59, %s60
      %p71 = scmp.eq.s32.totalorder %s23, 0
      %p72 = por %p70, %p71
      %p73 = scmp.ne.s32.totalorder %s59, %s60
      %p74 = scmp.eq.s32.totalorder %s24, 15
      %p75 = por %p73, %p74
      %p77 = scmp.ne.s32.totalorder %s60, %s76
      %p78 = scmp.eq.s32.totalorder %s24, 0
      %p79 = por %p77, %p78
      %p80 = scmp.le.s32.totalorder 1, %s18
      %p81 = scmp.lt.s32.totalorder %s18, 17
      %p82 = pnand %p80, %p81
      %p83 = pneg %p82
      // Predicated region
      $region9: #{tpu_custom_call.1} parent=5 // pred_check
        _
      $region10: #{tpu_custom_call.1} parent=5 // pred_check_branch
        %85 = sbr.rel (%p82) target = $region12
      $region11: #{tpu_custom_call.1} parent=5 // pred_region
        %s86 = ssub.s32 %s18, 1
      $region12: #{tpu_custom_call.1} parent=5 // pred_fallthru
        _
      %p87 = scmp.lt.s32.totalorder %s18, 16
      // Predicated region
      $region13: #{tpu_custom_call.1} parent=5 // pred_check
        %p88 = pneg %p87
      $region14: #{tpu_custom_call.1} parent=5 // pred_check_branch
        %90 = sbr.rel (%p88) target = $region16
      $region15: #{tpu_custom_call.1} parent=5 // pred_region
        // Predicated region
        $region17: #{tpu_custom_call.1} parent=15 // pred_check
          %p91 = pneg %p40
        $region18: #{tpu_custom_call.1} parent=15 // pred_check_branch
          %93 = sbr.rel (%p91) target = $region20
        $region19: #{tpu_custom_call.1} parent=15 // pred_region
          %s94 = sand.u32 %s30, 1
          %s95 = scalar_lea.sflag [#allocation5], %s94
          %s96 = sand.u32 %s30, 1
          %s97 = scalar_lea.vmem [#allocation4], %s96
          %s98 = sld [smem:[#allocation3 + %s18]]
          %s100 = ssub.s32 16, 16
          %101 = vsyncadd %s95, %s100
          %s102 = smul.addr %s98, 16
          %s103 = scalar_lea.hbm %s1, %s102
          %s105 = sshll.u32 %s97, 4
          %s106 = int_to_ptr.vmem [resolvable:$true] %s105
          %108 = dma.hbm_to_vmem [thread:$0]  %s103, 16, %s106, %s95
        $region20: #{tpu_custom_call.1} parent=15 // pred_fallthru
          _
      $region16: #{tpu_custom_call.1} parent=5 // pred_fallthru
        _
      %p109 = scmp.le.s32.totalorder 1, %s18
      %p110 = scmp.lt.s32.totalorder %s18, 17
      %p111 = pnand %p109, %p110
      %p112 = pneg %p111
      // Predicated region
      $region21: #{tpu_custom_call.1} parent=5 // pred_check
        _
      $region22: #{tpu_custom_call.1} parent=5 // pred_check_branch
        %114 = sbr.rel (%p111) target = $region24
      $region23: #{tpu_custom_call.1} parent=5 // pred_region
        %s115 = ssub.s32 %s18, 1
        %s116 = sand.u32 %s33, 1
        %s117 = scalar_lea.sflag [#allocation5], %s116
        %s118 = sand.u32 %s33, 1
        %s119 = scalar_lea.vmem [#allocation4], %s118
        // Predicated region
        $region25: #{tpu_custom_call.1} parent=23 // pred_check
          %p120 = pneg %p46
        $region26: #{tpu_custom_call.1} parent=23 // pred_check_branch
          %122 = sbr.rel (%p120) target = $region28
        $region27: #{tpu_custom_call.1} parent=23 // pred_region
          %123 = dma.done %s117, 16
        $region28: #{tpu_custom_call.1} parent=23 // pred_fallthru
          _
        %s124 = sand.u32 %s33, 1
        %s125 = scalar_lea.sflag [#allocation5], %s124
        %s126 = sand.u32 %s33, 1
        %s127 = scalar_lea.vmem [#allocation4], %s126
        %p128 = pneg %p46
        %p129 = pneg %p43
        %p130 = pneg %p72
        %p131 = pneg %p69
        %s132 = sand.u32 %s59, 1
        %s133 = scalar_lea.sflag [#allocation6], %s132
        %s134 = sand.u32 %s59, 1
        %s135 = scalar_lea.vmem [#allocation7], %s134
        %s136 = sld [smem:[#allocation3 + %s23]]
        %v137 = vld [vmem:[%s119] sm:$0x1]
        %v138 = vmul.f32 %v137, 11.313708
        %139 = vst [vmem:[%s135] sm:$0x1] %v138
        %s140 = sand.u32 %s59, 1
        %s141 = scalar_lea.sflag [#allocation6], %s140
        %s142 = sand.u32 %s59, 1
        %s143 = scalar_lea.vmem [#allocation7], %s142
        // Predicated region
        $region29: #{tpu_custom_call.1} parent=23 // pred_check
          %p144 = pneg %p69
        $region30: #{tpu_custom_call.1} parent=23 // pred_check_branch
          %146 = sbr.rel (%p144) target = $region32
        $region31: #{tpu_custom_call.1} parent=23 // pred_region
          %s148 = ssub.s32 16, 16
          %149 = vsyncadd %s141, %s148
          %s150 = smul.addr %s23, 16
          %s151 = scalar_lea.hbm %s2, %s150
          %s153 = sshll.u32 %s143, 4
          %s154 = int_to_ptr.vmem [resolvable:$true] %s153
          %156 = dma.vmem_to_hbm [thread:$0]  %s154, 16, %s151, %s141
        $region32: #{tpu_custom_call.1} parent=23 // pred_fallthru
          _
      $region24: #{tpu_custom_call.1} parent=5 // pred_fallthru
        _
      %p157 = scmp.le.s32.totalorder 2, %s18
      // Predicated region
      $region33: #{tpu_custom_call.1} parent=5 // pred_check
        %p158 = pneg %p157
      $region34: #{tpu_custom_call.1} parent=5 // pred_check_branch
        %160 = sbr.rel (%p158) target = $region36
      $region35: #{tpu_custom_call.1} parent=5 // pred_region
        %s161 = ssub.s32 %s18, 2
        // Predicated region
        $region37: #{tpu_custom_call.1} parent=35 // pred_check
          %p162 = pneg %p75
        $region38: #{tpu_custom_call.1} parent=35 // pred_check_branch
          %164 = sbr.rel (%p162) target = $region40
        $region39: #{tpu_custom_call.1} parent=35 // pred_region
          %s165 = sand.u32 %s60, 1
          %s166 = scalar_lea.sflag [#allocation6], %s165
          %s167 = sand.u32 %s60, 1
          %s168 = scalar_lea.vmem [#allocation7], %s167
          %169 = dma.done %s166, 16
        $region40: #{tpu_custom_call.1} parent=35 // pred_fallthru
          _
      $region36: #{tpu_custom_call.1} parent=5 // pred_fallthru
        _
    $region6: #{tpu_custom_call.1} parent=1 // loop_footer
      %s22 = sadd.s32 1, %s18
    $region7: #{tpu_custom_call.1} parent=1 // loop_footer_branch
      %17 = sbr.rel target = $region3
    $region8: #{tpu_custom_call.1} parent=1 // loop_exit
      _
    %170 = vsyncpa [#allocation5], 1
    %s171 = scalar_lea.sflag [#allocation5], 1
    %172 = vsyncpa %s171, 1
    %173 = vsyncpa [#allocation6], 1
    %s174 = scalar_lea.sflag [#allocation6], 1
    %175 = vsyncpa %s174, 1

</llo_original>
